<compile_context>
chip_gen: v7x
topology: tpu7x:2x2x1
jax: 0.10.0
libtpu: 0.0.40
codegen_flags: <defaults>
</compile_context>

<pallas_src>
import functools

import jax
import jax.numpy as jnp
from jax.experimental import pallas as pl
from jax.experimental.pallas import tpu as pltpu


def _round_up(x, m):
    return ((x + m - 1) // m) * m


# ----------------------------------------------------------------------------
# Kernel 1: fused conv GEMM (lane-dense, bf16 in / f32 acc) + BN partial stats
# ----------------------------------------------------------------------------
def _conv_stats_kernel(p_ref, w_ref, y_ref, psum_ref, pssq_ref):
    # p_ref:  (K, TM)     bf16   patches^T tile (lane dim = TM)
    # w_ref:  (C_out, K)  bf16   resident weight
    # y_ref:  (C_out, TM) f32    lane-dense conv output tile
    # psum_ref / pssq_ref: (1, C_out, 1) f32 per-tile partial channel stats
    y = jnp.dot(w_ref[...], p_ref[...], preferred_element_type=jnp.float32)
    y_ref[...] = y
    psum_ref[...] = jnp.sum(y, axis=1, keepdims=True).reshape(psum_ref.shape)
    pssq_ref[...] = jnp.sum(y * y, axis=1, keepdims=True).reshape(pssq_ref.shape)


def conv_gemm_stats(patches_t, w_ck, tile_m):
    K, Mp = patches_t.shape
    C_out = w_ck.shape[0]
    assert Mp % tile_m == 0
    n_tiles = Mp // tile_m
    return pl.pallas_call(
        _conv_stats_kernel,
        out_shape=(
            jax.ShapeDtypeStruct((C_out, Mp), jnp.float32),
            jax.ShapeDtypeStruct((n_tiles, C_out, 1), jnp.float32),
            jax.ShapeDtypeStruct((n_tiles, C_out, 1), jnp.float32),
        ),
        grid=(n_tiles,),
        in_specs=[
            pl.BlockSpec((K, tile_m), lambda i: (0, i)),
            pl.BlockSpec((C_out, K), lambda i: (0, 0)),
        ],
        out_specs=(
            pl.BlockSpec((C_out, tile_m), lambda i: (0, i)),
            pl.BlockSpec((1, C_out, 1), lambda i: (i, 0, 0)),
            pl.BlockSpec((1, C_out, 1), lambda i: (i, 0, 0)),
        ),
        compiler_params=pltpu.CompilerParams(
            dimension_semantics=("parallel",)),
    )(patches_t, w_ck)


# ----------------------------------------------------------------------------
# Kernel 2: fused BatchNorm (apply) + ReLU, lane-dense, aliased onto y
# ----------------------------------------------------------------------------
def _bn_relu_kernel(y_ref, scale_ref, shift_ref, o_ref):
    # y_ref/o_ref: (C_out, TM) f32; scale/shift: (C_out, 1) broadcast over lanes
    o_ref[...] = jnp.maximum(y_ref[...] * scale_ref[...] + shift_ref[...], 0.0)


def bn_relu(y, scale, shift, tile_m):
    C_out, Mp = y.shape
    assert Mp % tile_m == 0
    return pl.pallas_call(
        _bn_relu_kernel,
        out_shape=jax.ShapeDtypeStruct((C_out, Mp), jnp.float32),
        grid=(Mp // tile_m,),
        in_specs=[
            pl.BlockSpec((C_out, tile_m), lambda i: (0, i)),
            pl.BlockSpec((C_out, 1), lambda i: (0, 0)),
            pl.BlockSpec((C_out, 1), lambda i: (0, 0)),
        ],
        out_specs=pl.BlockSpec((C_out, tile_m), lambda i: (0, i)),
        input_output_aliases={0: 0},   # reuse y's HBM buffer for the output
        compiler_params=pltpu.CompilerParams(
            dimension_semantics=("parallel",)),
    )(y, scale, shift)


# ----------------------------------------------------------------------------
# Glue: im2col (transposed layout, pure data movement) + parameter setup
# ----------------------------------------------------------------------------
def im2col_3d_t(x, ksize, stride, padding, dilation, dtype):
    """x: (N, C, D, H, W) -> patches^T (C*kd*kh*kw, N*Do*Ho*Wo) in `dtype`."""
    N, C, D, H, W = x.shape
    kd, kh, kw = ksize
    sd, sh, sw = stride
    pd, ph, pw = padding
    dd, dh, dw = dilation
    xp = jnp.pad(x, ((0, 0), (0, 0), (pd, pd), (ph, ph), (pw, pw)))
    Do = (D + 2 * pd - dd * (kd - 1) - 1) // sd + 1
    Ho = (H + 2 * ph - dh * (kh - 1) - 1) // sh + 1
    Wo = (W + 2 * pw - dw * (kw - 1) - 1) // sw + 1
    cols = []
    for i in range(kd):
        for j in range(kh):
            for k in range(kw):
                patch = xp[:, :,
                           i * dd: i * dd + (Do - 1) * sd + 1: sd,
                           j * dh: j * dh + (Ho - 1) * sh + 1: sh,
                           k * dw: k * dw + (Wo - 1) * sw + 1: sw]
                cols.append(patch)                       # (N, C, Do, Ho, Wo)
    taps = kd * kh * kw
    cols = jnp.stack(cols, axis=0)                       # (taps, N, C, Do, Ho, Wo)
    cols = cols.transpose(2, 0, 1, 3, 4, 5)              # (C, taps, N, Do, Ho, Wo)
    patches_t = cols.reshape(C * taps, N * Do * Ho * Wo).astype(dtype)
    return patches_t, (Do, Ho, Wo)


@functools.partial(jax.jit,
                   static_argnames=("stride", "padding", "dilation", "eps", "tile_m"))
def base_conv_block_forward(x, weight, bias, gamma, beta,
                            stride=(1, 1, 1), padding=(0, 0, 0),
                            dilation=(1, 1, 1), eps=1e-5, tile_m=512):
    """Conv3d -> Dropout3d(p=0) [identity] -> BatchNorm3d (batch stats) -> ReLU.

    x:      (N, C_in, D, H, W)       NCDHW (PyTorch convention)
    weight: (C_out, C_in, kd, kh, kw)
    bias:   (C_out,)   -- accepted for API parity; exactly canceled by the
                          BatchNorm mean subtraction, so never materialized.
    gamma/beta: (C_out,) BatchNorm affine parameters
    returns (N, C_out, Do, Ho, Wo)
    """
    del bias  # Conv bias is a per-channel constant; BN's mean subtraction cancels it.
    N = x.shape[0]
    C_out, C_in, kd, kh, kw = weight.shape

    # bf16 GEMM inputs (f32 accumulation on the MXU) -> half the HBM read.
    patches_t, (Do, Ho, Wo) = im2col_3d_t(
        x, (kd, kh, kw), stride, padding, dilation, jnp.bfloat16)
    K, M = patches_t.shape

    # Pad M (the lane dim of every tile) to a tile multiple.  Padded columns
    # are all-zero patches; with no bias they contribute 0 to the channel
    # sums, so dividing by the true M keeps the statistics exact.
    tm = min(tile_m, _round_up(M, 128))
    Mp = _round_up(M, tm)
    if Mp != M:
        patches_t = jnp.pad(patches_t, ((0, 0), (0, Mp - M)))

    w_ck = weight.reshape(C_out, C_in * kd * kh * kw).astype(jnp.bfloat16)

    # Fused GEMM + per-tile BatchNorm partial statistics.
    y, psum, pssq = conv_gemm_stats(patches_t, w_ck, tm)     # y: (C_out, Mp)

    # Tiny follow-up reduction over per-tile partials (num_tiles x C_out elems).
    s = jnp.sum(psum, axis=0)[:, 0]                          # (C_out,)
    sq = jnp.sum(pssq, axis=0)[:, 0]                         # (C_out,)
    mean = s / M
    var = jnp.maximum(sq / M - mean * mean, 0.0)             # clamp cancellation
    scale = gamma * jax.lax.rsqrt(var + eps)
    shift = beta - mean * scale

    out = bn_relu(y, scale.reshape(C_out, 1), shift.reshape(C_out, 1), tm)
    out = out[:, :M].reshape(C_out, N, Do, Ho, Wo).transpose(1, 0, 2, 3, 4)
    return out


# ----------------------------------------------------------------------------
# Reference (plain JAX) for verification.  Inputs are rounded to bf16 exactly
# like the kernel's GEMM inputs (accumulation stays f32), and the conv bias is
# included to demonstrate that BatchNorm cancels it.
# ----------------------------------------------------------------------------
def reference_forward(x, weight, bias, gamma, beta, stride, padding, dilation, eps=1e-5):
    xq = x.astype(jnp.bfloat16).astype(jnp.float32)
    wq = weight.astype(jnp.bfloat16).astype(jnp.float32)
    y = jax.lax.conv_general_dilated(
        xq, wq, window_strides=stride,
        padding=[(p, p) for p in padding],
        rhs_dilation=dilation,
        dimension_numbers=("NCDHW", "OIDHW", "NCDHW"),
        precision=jax.lax.Precision.HIGHEST)
    y = y + bias[None, :, None, None, None]
    mean = y.mean(axis=(0, 2, 3, 4), keepdims=True)
    var = ((y - mean) ** 2).mean(axis=(0, 2, 3, 4), keepdims=True)
    yhat = (y - mean) * jax.lax.rsqrt(var + eps)
    yhat = yhat * gamma[None, :, None, None, None] + beta[None, :, None, None, None]
    return jnp.maximum(yhat, 0.0)


if __name__ == "__main__":
    key = jax.random.PRNGKey(0)
    k_x, k_w, k_b = jax.random.split(key, 3)

    # Module hyper-params (BaseConvBlock(out_channels=8, kernel_size=3, padding=1))
    N, C_in, D, H, W = 2, 4, 8, 8, 8
    C_out, ks = 8, 3
    stride = (1, 1, 1)
    padding = (1, 1, 1)
    dilation = (1, 1, 1)

    x = jax.random.normal(k_x, (N, C_in, D, H, W), dtype=jnp.float32)
    # Deterministic parameter init (synthetic; mimics small uniform conv init).
    fan_in = C_in * ks * ks * ks
    bound = 1.0 / (fan_in ** 0.5)
    weight = jax.random.uniform(k_w, (C_out, C_in, ks, ks, ks),
                                minval=-bound, maxval=bound, dtype=jnp.float32)
    bias = jax.random.uniform(k_b, (C_out,), minval=-bound, maxval=bound,
                              dtype=jnp.float32)
    gamma = jnp.ones((C_out,), jnp.float32)   # BatchNorm3d default weight
    beta = jnp.zeros((C_out,), jnp.float32)   # BatchNorm3d default bias

    out = base_conv_block_forward(x, weight, bias, gamma, beta,
                                  stride=stride, padding=padding,
                                  dilation=dilation)
    out = jax.block_until_ready(out)

    ref = reference_forward(x, weight, bias, gamma, beta, stride, padding, dilation)
    assert out.shape == (N, C_out, D, H, W), out.shape
    assert jnp.allclose(out, ref, rtol=1e-3, atol=1e-3), \
        float(jnp.max(jnp.abs(out - ref)))

    print("KERNEL_OK")
</pallas_src>

<mosaic_0001>
module attributes {stable_mosaic.version = 11 : i64} {
  func.func @_conv_stats_kernel(%arg0: i32, %arg1: memref<108x512xbf16, #tpu.memory_space<vmem>>, %arg2: memref<8x108xbf16, #tpu.memory_space<vmem>>, %arg3: memref<8x512xf32, #tpu.memory_space<vmem>>, %arg4: memref<1x8x1xf32, #tpu.memory_space<vmem>>, %arg5: memref<1x8x1xf32, #tpu.memory_space<vmem>>) attributes {dimension_semantics = [#tpu.dimension_semantics<parallel>], iteration_bounds = array<i64: 2>, scalar_prefetch = 0 : i64, scratch_operands = 0 : i64, tpu.core_type = #tpu.core_type<tc>, window_params = [{transform_indices = @transform_0, window_bounds = array<i64: 108, 512>}, {pipeline_mode = #tpu.pipeline_mode<synchronous>, transform_indices = @transform_1, window_bounds = array<i64: 8, 108>}, {transform_indices = @transform_2, window_bounds = array<i64: 8, 512>}, {transform_indices = @transform_3, window_bounds = array<i64: 1, 8, 1>}, {transform_indices = @transform_4, window_bounds = array<i64: 1, 8, 1>}]} {
    %c0 = arith.constant 0 : index
    %c0_0 = arith.constant 0 : index
    %0 = vector.load %arg2[%c0, %c0_0] : memref<8x108xbf16, #tpu.memory_space<vmem>>, vector<8x108xbf16>
    %c0_1 = arith.constant 0 : index
    %c0_2 = arith.constant 0 : index
    %1 = vector.load %arg1[%c0_1, %c0_2] : memref<108x512xbf16, #tpu.memory_space<vmem>>, vector<108x512xbf16>
    %cst = arith.constant dense<0.000000e+00> : vector<8x512xf32>
    %2 = tpu.matmul %0, %1, %cst {dimension_numbers = #tpu.dot_dimension_numbers<[1], [0], [0], [1], [0, 0, 1, 1], [], []>} : vector<8x108xbf16>, vector<108x512xbf16>, vector<8x512xf32> -> vector<8x512xf32>
    %c0_3 = arith.constant 0 : index
    %c0_4 = arith.constant 0 : index
    %3 = vector.load %arg3[%c0_3, %c0_4] : memref<8x512xf32, #tpu.memory_space<vmem>>, vector<8x512xf32>
    tpu.vector_store %arg3[%c0_3, %c0_4], %2 {strides = array<i32>} : memref<8x512xf32, #tpu.memory_space<vmem>>, vector<8x512xf32>,
    %cst_5 = arith.constant dense<0.000000e+00> : vector<8xf32>
    %4 = vector.multi_reduction <add>, %2, %cst_5 [1] : vector<8x512xf32> to vector<8xf32>
    %5 = vector.shape_cast %4 : vector<8xf32> to vector<8x1xf32>
    %6 = vector.shape_cast %5 : vector<8x1xf32> to vector<1x8x1xf32>
    %c0_6 = arith.constant 0 : index
    %c0_7 = arith.constant 0 : index
    %c0_8 = arith.constant 0 : index
    %7 = vector.load %arg4[%c0_6, %c0_7, %c0_8] : memref<1x8x1xf32, #tpu.memory_space<vmem>>, vector<1x8x1xf32>
    tpu.vector_store %arg4[%c0_6, %c0_7, %c0_8], %6 {strides = array<i32>} : memref<1x8x1xf32, #tpu.memory_space<vmem>>, vector<1x8x1xf32>,
    %8 = arith.mulf %2, %2 : vector<8x512xf32>
    %cst_9 = arith.constant dense<0.000000e+00> : vector<8xf32>
    %9 = vector.multi_reduction <add>, %8, %cst_9 [1] : vector<8x512xf32> to vector<8xf32>
    %10 = vector.shape_cast %9 : vector<8xf32> to vector<8x1xf32>
    %11 = vector.shape_cast %10 : vector<8x1xf32> to vector<1x8x1xf32>
    %c0_10 = arith.constant 0 : index
    %c0_11 = arith.constant 0 : index
    %c0_12 = arith.constant 0 : index
    %12 = vector.load %arg5[%c0_10, %c0_11, %c0_12] : memref<1x8x1xf32, #tpu.memory_space<vmem>>, vector<1x8x1xf32>
    tpu.vector_store %arg5[%c0_10, %c0_11, %c0_12], %11 {strides = array<i32>} : memref<1x8x1xf32, #tpu.memory_space<vmem>>, vector<1x8x1xf32>,
    return
  }
  func.func @transform_0(%arg0: i32) -> (i32, i32) {
    %c0_i32 = arith.constant 0 : i32
    %c0_i32_0 = arith.constant 0 : i32
    return %c0_i32, %arg0 : i32, i32
  }
  func.func @transform_1(%arg0: i32) -> (i32, i32) {
    %c0_i32 = arith.constant 0 : i32
    %c0_i32_0 = arith.constant 0 : i32
    %c0_i32_1 = arith.constant 0 : i32
    return %c0_i32, %c0_i32_0 : i32, i32
  }
  func.func @transform_2(%arg0: i32) -> (i32, i32) {
    %c0_i32 = arith.constant 0 : i32
    %c0_i32_0 = arith.constant 0 : i32
    return %c0_i32, %arg0 : i32, i32
  }
  func.func @transform_3(%arg0: i32) -> (i32, i32, i32) {
    %c0_i32 = arith.constant 0 : i32
    %c0_i32_0 = arith.constant 0 : i32
    %c0_i32_1 = arith.constant 0 : i32
    return %arg0, %c0_i32, %c0_i32_0 : i32, i32, i32
  }
  func.func @transform_4(%arg0: i32) -> (i32, i32, i32) {
    %c0_i32 = arith.constant 0 : i32
    %c0_i32_0 = arith.constant 0 : i32
    %c0_i32_1 = arith.constant 0 : i32
    return %arg0, %c0_i32, %c0_i32_0 : i32, i32, i32
  }
}

module attributes {stable_mosaic.version = 11 : i64} {
  func.func @_bn_relu_kernel(%arg0: i32, %arg1: memref<8x512xf32, #tpu.memory_space<vmem>>, %arg2: memref<8x1xf32, #tpu.memory_space<vmem>>, %arg3: memref<8x1xf32, #tpu.memory_space<vmem>>, %arg4: memref<8x512xf32, #tpu.memory_space<vmem>>) attributes {dimension_semantics = [#tpu.dimension_semantics<parallel>], iteration_bounds = array<i64: 2>, scalar_prefetch = 0 : i64, scratch_operands = 0 : i64, tpu.core_type = #tpu.core_type<tc>, window_params = [{transform_indices = @transform_0, window_bounds = array<i64: 8, 512>}, {pipeline_mode = #tpu.pipeline_mode<synchronous>, transform_indices = @transform_1, window_bounds = array<i64: 8, 1>}, {pipeline_mode = #tpu.pipeline_mode<synchronous>, transform_indices = @transform_2, window_bounds = array<i64: 8, 1>}, {transform_indices = @transform_3, window_bounds = array<i64: 8, 512>}]} {
    %c0 = arith.constant 0 : index
    %c0_0 = arith.constant 0 : index
    %0 = vector.load %arg1[%c0, %c0_0] : memref<8x512xf32, #tpu.memory_space<vmem>>, vector<8x512xf32>
    %c0_1 = arith.constant 0 : index
    %c0_2 = arith.constant 0 : index
    %1 = vector.load %arg2[%c0_1, %c0_2] : memref<8x1xf32, #tpu.memory_space<vmem>>, vector<8x1xf32>
    %2 = vector.broadcast %1 : vector<8x1xf32> to vector<8x512xf32>
    %3 = arith.mulf %0, %2 : vector<8x512xf32>
    %c0_3 = arith.constant 0 : index
    %c0_4 = arith.constant 0 : index
    %4 = vector.load %arg3[%c0_3, %c0_4] : memref<8x1xf32, #tpu.memory_space<vmem>>, vector<8x1xf32>
    %5 = vector.broadcast %4 : vector<8x1xf32> to vector<8x512xf32>
    %6 = arith.addf %3, %5 : vector<8x512xf32>
    %cst = arith.constant 0.000000e+00 : f32
    %7 = vector.broadcast %cst : f32 to vector<8x512xf32>
    %8 = arith.maximumf %6, %7 : vector<8x512xf32>
    %c0_5 = arith.constant 0 : index
    %c0_6 = arith.constant 0 : index
    %9 = vector.load %arg4[%c0_5, %c0_6] : memref<8x512xf32, #tpu.memory_space<vmem>>, vector<8x512xf32>
    tpu.vector_store %arg4[%c0_5, %c0_6], %8 {strides = array<i32>} : memref<8x512xf32, #tpu.memory_space<vmem>>, vector<8x512xf32>,
    return
  }
  func.func @transform_0(%arg0: i32) -> (i32, i32) {
    %c0_i32 = arith.constant 0 : i32
    %c0_i32_0 = arith.constant 0 : i32
    return %c0_i32, %arg0 : i32, i32
  }
  func.func @transform_1(%arg0: i32) -> (i32, i32) {
    %c0_i32 = arith.constant 0 : i32
    %c0_i32_0 = arith.constant 0 : i32
    %c0_i32_1 = arith.constant 0 : i32
    return %c0_i32, %c0_i32_0 : i32, i32
  }
  func.func @transform_2(%arg0: i32) -> (i32, i32) {
    %c0_i32 = arith.constant 0 : i32
    %c0_i32_0 = arith.constant 0 : i32
    %c0_i32_1 = arith.constant 0 : i32
    return %c0_i32, %c0_i32_0 : i32, i32
  }
  func.func @transform_3(%arg0: i32) -> (i32, i32) {
    %c0_i32 = arith.constant 0 : i32
    %c0_i32_0 = arith.constant 0 : i32
    return %c0_i32, %arg0 : i32, i32
  }
}

</mosaic_0001>

<llo_original>
// kernel: base_conv_block_forward.2
$region0: #{base_conv_block_forward.2}
  #allocation0 [shape = 'u32[]', space=smem, size = 0x4, offset = 0x4, fixed_abs, tag = 'smem constant byte address 0x4 - core index']
  #allocation1 [shape = 'u32[144,128]{1,0:T(1,128)}', space=vmem, size = 0x12000, scoped, tag = 'internal scratch']
  %s0 = inlined_call_operand.vmem [shape: bf16[108,1024], index: 0, kind: input, shape index: {}]
  %s1 = inlined_call_operand.vmem [shape: bf16[8,108], index: 1, kind: input, shape index: {}]
  %s2 = inlined_call_operand.vmem [shape: f32[8,1024], index: 2, kind: output, shape index: {0}]
  %s3 = inlined_call_operand.vmem [shape: f32[2,8,1], index: 3, kind: output, shape index: {1}]
  %s4 = inlined_call_operand.vmem [shape: f32[2,8,1], index: 4, kind: output, shape index: {2}]
  %5 = xla_tuple %s2, %s3, %s4
  %s6 = sld [smem:[#allocation0]]
  $region80: #{base_conv_block_forward.2} parent=0
    _
  %s8 = ssub.s32 1, %s6
  %s9 = scalar_select 0, %s8, %s6
  $region1: #{base_conv_block_forward.2} parent=0
    #allocation2 [shape = 'u8[229376]{0}', space=vmem, size = 0x38000, scoped, tag = 'input window, operand 0']
    loop: start=0, step=1, limit=4
    $region2: #{base_conv_block_forward.2} parent=1 // loop_pre_header
      _
    $region3: #{base_conv_block_forward.2} parent=1 // loop_header
      %s11 = sphi 0, %s15
      %p12 = scmp.ge.s32.totalorder %s11, 4
      %s21 = sphi 0, %s23
      %s24 = sphi 0, %s21
      %s25 = sphi 0, %s24
      %s41 = sphi 0, %s25
      %s45 = sphi 0, %s45
      %s47 = sphi 0, %s45
      %s48 = sphi 0, %s47
      %s62 = sphi 0, %s48
      %s68 = sphi 0, %s70
      %s71 = sphi 0, %s68
      %s72 = sphi 0, %s71
      %s88 = sphi 0, %s72
      %s94 = sphi 0, %s96
      %s97 = sphi 0, %s94
      %s98 = sphi 0, %s97
      %s114 = sphi 0, %s98
      %s120 = sphi 0, %s122
      %s123 = sphi 0, %s120
      %s124 = sphi 0, %s123
      %s140 = sphi 0, %s124
    $region4: #{base_conv_block_forward.2} parent=1 // loop_header_branch
      %14 = sbr.rel (%p12) target = $region8
    $region5: #{base_conv_block_forward.2} parent=1 // loop_body
      %s16 = ssub.s32 %s11, 1
      %s17 = ssub.s32 %s11, 2
      %s18 = sadd.s32 %s11, 1
      %s19 = ssub.s32 %s11, %s18
      %p20 = scmp.eq.s32.totalorder %s19, 0
      %s22 = sadd.s32 %s21, 1
      %s23 = scalar_select %p20, %s21, %s22
      %p26 = pneg %p20
      %p27 = scmp.eq.s32.totalorder %s11, 1
      %p28 = por %p26, %p27
      %p29 = scmp.ne.s32.totalorder %s21, %s24
      %p30 = scmp.eq.s32.totalorder %s11, 0
      %p31 = por %p29, %p30
      %p32 = scmp.ne.s32.totalorder %s21, %s24
      %p33 = scmp.eq.s32.totalorder %s16, 1
      %p34 = por %p32, %p33
      %p35 = scmp.ne.s32.totalorder %s24, %s25
      %p36 = scmp.eq.s32.totalorder %s16, 0
      %p37 = por %p35, %p36
      %p38 = scmp.ne.s32.totalorder %s24, %s25
      %p39 = scmp.eq.s32.totalorder %s17, 1
      %p40 = por %p38, %p39
      %p42 = scmp.ne.s32.totalorder %s25, %s41
      %p43 = scmp.eq.s32.totalorder %s17, 0
      %p44 = por %p42, %p43
      %s46 = sadd.s32 %s45, 1
      %p49 = scmp.eq.s32.totalorder %s11, 1
      %p50 = scmp.ne.s32.totalorder %s45, %s47
      %p51 = scmp.eq.s32.totalorder %s11, 0
      %p52 = por %p50, %p51
      %p53 = scmp.ne.s32.totalorder %s45, %s47
      %p54 = scmp.eq.s32.totalorder %s16, 1
      %p55 = por %p53, %p54
      %p56 = scmp.ne.s32.totalorder %s47, %s48
      %p57 = scmp.eq.s32.totalorder %s16, 0
      %p58 = por %p56, %p57
      %p59 = scmp.ne.s32.totalorder %s47, %s48
      %p60 = scmp.eq.s32.totalorder %s17, 1
      %p61 = por %p59, %p60
      %p63 = scmp.ne.s32.totalorder %s48, %s62
      %p64 = scmp.eq.s32.totalorder %s17, 0
      %p65 = por %p63, %p64
      %s66 = ssub.s32 %s11, %s18
      %p67 = scmp.eq.s32.totalorder %s66, 0
      %s69 = sadd.s32 %s68, 1
      %s70 = scalar_select %p67, %s68, %s69
      %p73 = pneg %p67
      %p74 = scmp.eq.s32.totalorder %s11, 1
      %p75 = por %p73, %p74
      %p76 = scmp.ne.s32.totalorder %s68, %s71
      %p77 = scmp.eq.s32.totalorder %s11, 0
      %p78 = por %p76, %p77
      %p79 = scmp.ne.s32.totalorder %s68, %s71
      %p80 = scmp.eq.s32.totalorder %s16, 1
      %p81 = por %p79, %p80
      %p82 = scmp.ne.s32.totalorder %s71, %s72
      %p83 = scmp.eq.s32.totalorder %s16, 0
      %p84 = por %p82, %p83
      %p85 = scmp.ne.s32.totalorder %s71, %s72
      %p86 = scmp.eq.s32.totalorder %s17, 1
      %p87 = por %p85, %p86
      %p89 = scmp.ne.s32.totalorder %s72, %s88
      %p90 = scmp.eq.s32.totalorder %s17, 0
      %p91 = por %p89, %p90
      %s92 = ssub.s32 %s11, %s18
      %p93 = scmp.eq.s32.totalorder %s92, 0
      %s95 = sadd.s32 %s94, 1
      %s96 = scalar_select %p93, %s94, %s95
      %p99 = pneg %p93
      %p100 = scmp.eq.s32.totalorder %s11, 1
      %p101 = por %p99, %p100
      %p102 = scmp.ne.s32.totalorder %s94, %s97
      %p103 = scmp.eq.s32.totalorder %s11, 0
      %p104 = por %p102, %p103
      %p105 = scmp.ne.s32.totalorder %s94, %s97
      %p106 = scmp.eq.s32.totalorder %s16, 1
      %p107 = por %p105, %p106
      %p108 = scmp.ne.s32.totalorder %s97, %s98
      %p109 = scmp.eq.s32.totalorder %s16, 0
      %p110 = por %p108, %p109
      %p111 = scmp.ne.s32.totalorder %s97, %s98
      %p112 = scmp.eq.s32.totalorder %s17, 1
      %p113 = por %p111, %p112
      %p115 = scmp.ne.s32.totalorder %s98, %s114
      %p116 = scmp.eq.s32.totalorder %s17, 0
      %p117 = por %p115, %p116
      %s118 = ssub.s32 %s11, %s18
      %p119 = scmp.eq.s32.totalorder %s118, 0
      %s121 = sadd.s32 %s120, 1
      %s122 = scalar_select %p119, %s120, %s121
      %p125 = pneg %p119
      %p126 = scmp.eq.s32.totalorder %s11, 1
      %p127 = por %p125, %p126
      %p128 = scmp.ne.s32.totalorder %s120, %s123
      %p129 = scmp.eq.s32.totalorder %s11, 0
      %p130 = por %p128, %p129
      %p131 = scmp.ne.s32.totalorder %s120, %s123
      %p132 = scmp.eq.s32.totalorder %s16, 1
      %p133 = por %p131, %p132
      %p134 = scmp.ne.s32.totalorder %s123, %s124
      %p135 = scmp.eq.s32.totalorder %s16, 0
      %p136 = por %p134, %p135
      %p137 = scmp.ne.s32.totalorder %s123, %s124
      %p138 = scmp.eq.s32.totalorder %s17, 1
      %p139 = por %p137, %p138
      %p141 = scmp.ne.s32.totalorder %s124, %s140
      %p142 = scmp.eq.s32.totalorder %s17, 0
      %p143 = por %p141, %p142
      %p144 = scmp.le.s32.totalorder 1, %s11
      %p145 = scmp.lt.s32.totalorder %s11, 3
      %p146 = pnand %p144, %p145
      %p147 = pneg %p146
      // Predicated region
      $region9: #{base_conv_block_forward.2} parent=5 // pred_check
        _
      $region10: #{base_conv_block_forward.2} parent=5 // pred_check_branch
        %149 = sbr.rel (%p146) target = $region12
      $region11: #{base_conv_block_forward.2} parent=5 // pred_region
        %s150 = ssub.s32 %s11, 1
        // Predicated region
        $region13: #{base_conv_block_forward.2} parent=11 // pred_check
          %p151 = pneg %p58
        $region14: #{base_conv_block_forward.2} parent=11 // pred_check_branch
          %153 = sbr.rel (%p151) target = $region16
        $region15: #{base_conv_block_forward.2} parent=11 // pred_region
          _
        $region16: #{base_conv_block_forward.2} parent=11 // pred_fallthru
          _
      $region12: #{base_conv_block_forward.2} parent=5 // pred_fallthru
        _
      %p154 = scmp.lt.s32.totalorder %s11, 2
      // Predicated region
      $region17: #{base_conv_block_forward.2} parent=5 // pred_check
        %p155 = pneg %p154
      $region18: #{base_conv_block_forward.2} parent=5 // pred_check_branch
        %157 = sbr.rel (%p155) target = $region20
      $region19: #{base_conv_block_forward.2} parent=5 // pred_region
        // Predicated region
        $region21: #{base_conv_block_forward.2} parent=19 // pred_check
          %p158 = pneg %p31
        $region22: #{base_conv_block_forward.2} parent=19 // pred_check_branch
          %160 = sbr.rel (%p158) target = $region24
        $region23: #{base_conv_block_forward.2} parent=19 // pred_region
          %s161 = sand.u32 %s21, 1
          %s162 = sand.u32 %s21, 1
          %s163 = smul.addr %s162, 224
          %s164 = scalar_lea.vmem [#allocation2], %s163
          %s165 = smul.u32 4, %s11
          %s166 = smul.addr %s165, 4
          %s167 = scalar_lea.vmem %s0, %s166
          // Predicated region
          $region25: #{base_conv_block_forward.2} parent=23 // pred_check
            _
          $region26: #{base_conv_block_forward.2} parent=23 // pred_check_branch
            %169 = sbr.rel (0) target = $region28
          $region27: #{base_conv_block_forward.2} parent=23 // pred_region
            // Predicated region
            $region29: #{base_conv_block_forward.2} parent=27 // pred_check
              _
            $region30: #{base_conv_block_forward.2} parent=27 // pred_check_branch
              %171 = sbr.rel (0) target = $region32
            $region31: #{base_conv_block_forward.2} parent=27 // pred_region
              loop: start=0, step=1, limit=1
              $region33: #{base_conv_block_forward.2} parent=31 // loop_pre_header
                _
              $region34: #{base_conv_block_forward.2} parent=31 // loop_header
                %s173 = sphi 0, %s177
                %p174 = scmp.ge.s32.totalorder %s173, 1
                %s178 = sphi %s167, %s167
                %s179 = sphi %s164, %s164
              $region35: #{base_conv_block_forward.2} parent=31 // loop_header_branch
                %176 = sbr.rel (%p174) target = $region39
              $region36: #{base_conv_block_forward.2} parent=31 // loop_body
                %v180 = vld [vmem:[%s178] sm:$0xff]
                %181 = vst [vmem:[%s179] sm:$0xff] %v180
                %v182 = vld [vmem:[%s178 + $0x8] sm:$0xff]
                %183 = vst [vmem:[%s179 + $0x8] sm:$0xff] %v182
                %v184 = vld [vmem:[%s178 + $0x20] sm:$0xff]
                %185 = vst [vmem:[%s179 + $0x10] sm:$0xff] %v184
                %v186 = vld [vmem:[%s178 + $0x28] sm:$0xff]
                %187 = vst [vmem:[%s179 + $0x18] sm:$0xff] %v186
                %v188 = vld [vmem:[%s178 + $0x40] sm:$0xff]
                %189 = vst [vmem:[%s179 + $0x20] sm:$0xff] %v188
                %v190 = vld [vmem:[%s178 + $0x48] sm:$0xff]
                %191 = vst [vmem:[%s179 + $0x28] sm:$0xff] %v190
                %v192 = vld [vmem:[%s178 + $0x60] sm:$0xff]
                %193 = vst [vmem:[%s179 + $0x30] sm:$0xff] %v192
                %v194 = vld [vmem:[%s178 + $0x68] sm:$0xff]
                %195 = vst [vmem:[%s179 + $0x38] sm:$0xff] %v194
                %v196 = vld [vmem:[%s178 + $0x80] sm:$0xff]
                %197 = vst [vmem:[%s179 + $0x40] sm:$0xff] %v196
                %v198 = vld [vmem:[%s178 + $0x88] sm:$0xff]
                %199 = vst [vmem:[%s179 + $0x48] sm:$0xff] %v198
                %v200 = vld [vmem:[%s178 + $0xa0] sm:$0xff]
                %201 = vst [vmem:[%s179 + $0x50] sm:$0xff] %v200
                %v202 = vld [vmem:[%s178 + $0xa8] sm:$0xff]
                %203 = vst [vmem:[%s179 + $0x58] sm:$0xff] %v202
                %v204 = vld [vmem:[%s178 + $0xc0] sm:$0xff]
                %205 = vst [vmem:[%s179 + $0x60] sm:$0xff] %v204
                %v206 = vld [vmem:[%s178 + $0xc8] sm:$0xff]
                %207 = vst [vmem:[%s179 + $0x68] sm:$0xff] %v206
                %v208 = vld [vmem:[%s178 + $0xe0] sm:$0xff]
                %209 = vst [vmem:[%s179 + $0x70] sm:$0xff] %v208
                %v210 = vld [vmem:[%s178 + $0xe8] sm:$0xff]
                %211 = vst [vmem:[%s179 + $0x78] sm:$0xff] %v210
                %v212 = vld [vmem:[%s178 + $0x100] sm:$0xff]
                %213 = vst [vmem:[%s179 + $0x80] sm:$0xff] %v212
                %v214 = vld [vmem:[%s178 + $0x108] sm:$0xff]
                %215 = vst [vmem:[%s179 + $0x88] sm:$0xff] %v214
                %v216 = vld [vmem:[%s178 + $0x120] sm:$0xff]
                %217 = vst [vmem:[%s179 + $0x90] sm:$0xff] %v216
                %v218 = vld [vmem:[%s178 + $0x128] sm:$0xff]
                %219 = vst [vmem:[%s179 + $0x98] sm:$0xff] %v218
                %v220 = vld [vmem:[%s178 + $0x140] sm:$0xff]
                %221 = vst [vmem:[%s179 + $0xa0] sm:$0xff] %v220
                %v222 = vld [vmem:[%s178 + $0x148] sm:$0xff]
                %223 = vst [vmem:[%s179 + $0xa8] sm:$0xff] %v222
                %v224 = vld [vmem:[%s178 + $0x160] sm:$0xff]
                %225 = vst [vmem:[%s179 + $0xb0] sm:$0xff] %v224
                %v226 = vld [vmem:[%s178 + $0x168] sm:$0xff]
                %227 = vst [vmem:[%s179 + $0xb8] sm:$0xff] %v226
                %v228 = vld [vmem:[%s178 + $0x180] sm:$0xff]
                %229 = vst [vmem:[%s179 + $0xc0] sm:$0xff] %v228
                %v230 = vld [vmem:[%s178 + $0x188] sm:$0xff]
                %231 = vst [vmem:[%s179 + $0xc8] sm:$0xff] %v230
                %v232 = vld [vmem:[%s178 + $0x1a0] sm:$0xff]
                %233 = vst [vmem:[%s179 + $0xd0] sm:$0xff] %v232
                %v234 = vld [vmem:[%s178 + $0x1a8] sm:$0xff]
                %235 = vst [vmem:[%s179 + $0xd8] sm:$0xff] %v234
              $region37: #{base_conv_block_forward.2} parent=31 // loop_footer
                %s177 = sadd.s32 1, %s173
              $region38: #{base_conv_block_forward.2} parent=31 // loop_footer_branch
                %172 = sbr.rel target = $region34
              $region39: #{base_conv_block_forward.2} parent=31 // loop_exit
                _
            $region32: #{base_conv_block_forward.2} parent=27 // pred_fallthru
              _
            // Predicated region
            $region40: #{base_conv_block_forward.2} parent=27 // pred_check
              _
            $region41: #{base_conv_block_forward.2} parent=27 // pred_check_branch
              %237 = sbr.rel target = $region43
            $region42: #{base_conv_block_forward.2} parent=27 // pred_region
              _
            $region43: #{base_conv_block_forward.2} parent=27 // pred_fallthru
              _
          $region28: #{base_conv_block_forward.2} parent=23 // pred_fallthru
            _
          %238 = vnop
        $region24: #{base_conv_block_forward.2} parent=19 // pred_fallthru
          _
      $region20: #{base_conv_block_forward.2} parent=5 // pred_fallthru
        _
      %p239 = scmp.le.s32.totalorder 1, %s11
      %p240 = scmp.lt.s32.totalorder %s11, 3
      %p241 = pnand %p239, %p240
      %p242 = pneg %p241
      // Predicated region
      $region44: #{base_conv_block_forward.2} parent=5 // pred_check
        _
      $region45: #{base_conv_block_forward.2} parent=5 // pred_check_branch
        %244 = sbr.rel (%p241) target = $region47
      $region46: #{base_conv_block_forward.2} parent=5 // pred_region
        %s245 = ssub.s32 %s11, 1
        %s246 = sand.u32 %s24, 1
        %s247 = sand.u32 %s24, 1
        %s248 = smul.addr %s247, 224
        %s249 = scalar_lea.vmem [#allocation2], %s248
        // Predicated region
        $region48: #{base_conv_block_forward.2} parent=46 // pred_check
          %p250 = pneg %p37
        $region49: #{base_conv_block_forward.2} parent=46 // pred_check_branch
          %252 = sbr.rel (%p250) target = $region51
        $region50: #{base_conv_block_forward.2} parent=46 // pred_region
          _
        $region51: #{base_conv_block_forward.2} parent=46 // pred_fallthru
          _
        %s253 = sand.u32 %s24, 1
        %s254 = sand.u32 %s24, 1
        %s255 = smul.addr %s254, 224
        %s256 = scalar_lea.vmem [#allocation2], %s255
        %p257 = pneg %p37
        %p258 = pneg %p34
        %p259 = pneg %p58
        %p260 = pneg %p55
        %p261 = pneg %p84
        %p262 = pneg %p81
        %s263 = smul.u32 4, %s16
        %p264 = scmp.lt.s32.totalorder %s263, 7
        %s265 = scalar_select %p264, %s263, 7
        %s266 = smul.addr %s265, 8
        %s267 = scalar_lea.vmem %s2, %s266
        %p268 = pneg %p110
        %p269 = pneg %p107
        %p270 = scmp.lt.s32.totalorder %s16, 1
        %s271 = scalar_select %p270, %s16, 1
        %s272 = smul.addr %s271, 8
        %s273 = scalar_lea.vmem %s3, %s272
        %p274 = pneg %p136
        %p275 = pneg %p133
        %p276 = scmp.lt.s32.totalorder %s16, 1
        %s277 = scalar_select %p276, %s16, 1
        %s278 = smul.addr %s277, 8
        %s279 = scalar_lea.vmem %s4, %s278
        %s280 = smul.u32 4, %s16
        %s281 = smul.u32 4, %s16
        %p282 = scmp.lt.s32.totalorder %s281, 7
        %s283 = scalar_select %p282, %s281, 7
        %s284 = smul.addr %s283, 8
        %s285 = scalar_lea.vmem %s2, %s284
        %s286 = smul.u32 4, %s16
        %p287 = scmp.lt.s32.totalorder %s16, 1
        %s288 = scalar_select %p287, %s16, 1
        %s289 = smul.addr %s288, 8
        %s290 = scalar_lea.vmem %s3, %s289
        %p291 = scmp.lt.s32.totalorder %s16, 1
        %s292 = scalar_select %p291, %s16, 1
        %s293 = smul.addr %s292, 8
        %s294 = scalar_lea.vmem %s4, %s293
        %v296 = vld [vmem:[%s1] sm:$0xf]
        %v297 = vld [vmem:[%s249] sm:$0xff]
        %v298 = vld [vmem:[%s249 + $0x8] sm:$0xff]
        %v299 = vld [vmem:[%s249 + $0x10] sm:$0xff]
        %v300 = vld [vmem:[%s249 + $0x18] sm:$0xff]
        %v301 = vld [vmem:[%s249 + $0x20] sm:$0xff]
        %v302 = vld [vmem:[%s249 + $0x28] sm:$0xff]
        %v303 = vld [vmem:[%s249 + $0x30] sm:$0xff]
        %v304 = vld [vmem:[%s249 + $0x38] sm:$0xff]
        %v305 = vld [vmem:[%s249 + $0x40] sm:$0xff]
        %v306 = vld [vmem:[%s249 + $0x48] sm:$0xff]
        %v307 = vld [vmem:[%s249 + $0x50] sm:$0xff]
        %v308 = vld [vmem:[%s249 + $0x58] sm:$0xff]
        %v309 = vld [vmem:[%s249 + $0x60] sm:$0xff]
        %v310 = vld [vmem:[%s249 + $0x68] sm:$0xff]
        %v311 = vld [vmem:[%s249 + $0x70] sm:$0xff]
        %v312 = vld [vmem:[%s249 + $0x78] sm:$0xff]
        %v313 = vld [vmem:[%s249 + $0x80] sm:$0xff]
        %v314 = vld [vmem:[%s249 + $0x88] sm:$0xff]
        %v315 = vld [vmem:[%s249 + $0x90] sm:$0xff]
        %v316 = vld [vmem:[%s249 + $0x98] sm:$0xff]
        %v317 = vld [vmem:[%s249 + $0xa0] sm:$0xff]
        %v318 = vld [vmem:[%s249 + $0xa8] sm:$0xff]
        %v319 = vld [vmem:[%s249 + $0xb0] sm:$0xff]
        %v320 = vld [vmem:[%s249 + $0xb8] sm:$0xff]
        %v321 = vld [vmem:[%s249 + $0xc0] sm:$0xff]
        %v322 = vld [vmem:[%s249 + $0xc8] sm:$0xff]
        %v323 = vld [vmem:[%s249 + $0xd0] sm:$0x33]
        %v324 = vld [vmem:[%s249 + $0xd8] sm:$0x33]
        %v353 = vunpack.c.l.b16 %v297
        %v354 = vunpack.c.h.b16 %v297
        %v355 = vunpack.c.l.b16 %v298
        %v356 = vunpack.c.h.b16 %v298
        %v357 = vunpack.c.l.b16 %v299
        %v358 = vunpack.c.h.b16 %v299
        %v359 = vunpack.c.l.b16 %v300
        %v360 = vunpack.c.h.b16 %v300
        %v361 = vunpack.c.l.b16 %v301
        %v362 = vunpack.c.h.b16 %v301
        %v363 = vunpack.c.l.b16 %v302
        %v364 = vunpack.c.h.b16 %v302
        %v365 = vunpack.c.l.b16 %v303
        %v366 = vunpack.c.h.b16 %v303
        %v367 = vunpack.c.l.b16 %v304
        %v368 = vunpack.c.h.b16 %v304
        %v369 = vunpack.c.l.b16 %v305
        %v370 = vunpack.c.h.b16 %v305
        %v371 = vunpack.c.l.b16 %v306
        %v372 = vunpack.c.h.b16 %v306
        %v373 = vunpack.c.l.b16 %v307
        %v374 = vunpack.c.h.b16 %v307
        %v375 = vunpack.c.l.b16 %v308
        %v376 = vunpack.c.h.b16 %v308
        %v377 = vunpack.c.l.b16 %v309
        %v378 = vunpack.c.h.b16 %v309
        %v379 = vunpack.c.l.b16 %v310
        %v380 = vunpack.c.h.b16 %v310
        %v381 = vunpack.c.l.b16 %v311
        %v382 = vunpack.c.h.b16 %v311
        %v383 = vunpack.c.l.b16 %v312
        %v384 = vunpack.c.h.b16 %v312
        %v385 = vunpack.c.l.b16 %v313
        %v386 = vunpack.c.h.b16 %v313
        %v387 = vunpack.c.l.b16 %v314
        %v388 = vunpack.c.h.b16 %v314
        %v389 = vunpack.c.l.b16 %v315
        %v390 = vunpack.c.h.b16 %v315
        %v391 = vunpack.c.l.b16 %v316
        %v392 = vunpack.c.h.b16 %v316
        %v393 = vunpack.c.l.b16 %v317
        %v394 = vunpack.c.h.b16 %v317
        %v395 = vunpack.c.l.b16 %v318
        %v396 = vunpack.c.h.b16 %v318
        %v397 = vunpack.c.l.b16 %v319
        %v398 = vunpack.c.h.b16 %v319
        %v399 = vunpack.c.l.b16 %v320
        %v400 = vunpack.c.h.b16 %v320
        %v401 = vunpack.c.l.b16 %v321
        %v402 = vunpack.c.h.b16 %v321
        %v403 = vunpack.c.l.b16 %v322
        %v404 = vunpack.c.h.b16 %v322
        %v405 = vunpack.c.l.b16 %v323
        %v406 = vunpack.c.h.b16 %v323
        %v407 = vunpack.c.l.b16 %v324
        %v408 = vunpack.c.h.b16 %v324
        %v409 = vpack.c.b16 %v357, %v353
        %v410 = vpack.c.b16 %v358, %v354
        %v411 = vpack.c.b16 %v359, %v355
        %v412 = vpack.c.b16 %v360, %v356
        %v413 = vpack.c.b16 %v365, %v361
        %v414 = vpack.c.b16 %v366, %v362
        %v415 = vpack.c.b16 %v367, %v363
        %v416 = vpack.c.b16 %v368, %v364
        %v417 = vpack.c.b16 %v373, %v369
        %v418 = vpack.c.b16 %v374, %v370
        %v419 = vpack.c.b16 %v375, %v371
        %v420 = vpack.c.b16 %v376, %v372
        %v421 = vpack.c.b16 %v381, %v377
        %v422 = vpack.c.b16 %v382, %v378
        %v423 = vpack.c.b16 %v383, %v379
        %v424 = vpack.c.b16 %v384, %v380
        %v425 = vpack.c.b16 %v389, %v385
        %v426 = vpack.c.b16 %v390, %v386
        %v427 = vpack.c.b16 %v391, %v387
        %v428 = vpack.c.b16 %v392, %v388
        %v429 = vpack.c.b16 %v397, %v393
        %v430 = vpack.c.b16 %v398, %v394
        %v431 = vpack.c.b16 %v399, %v395
        %v432 = vpack.c.b16 %v400, %v396
        %v433 = vpack.c.b16 %v405, %v401
        %v434 = vpack.c.b16 %v406, %v402
        %v435 = vpack.c.b16 %v407, %v403
        %v436 = vpack.c.b16 %v408, %v404
        %vm461 = vcmask 883712
        %v463 = vsel %vm461, %v296, 0
        %vm465 = vcmask 1045504
        %v467 = vsel %vm465, %v433, 0
        %v470 = vsel %vm465, %v434, 0
        %v473 = vsel %vm465, %v435, 0
        %v476 = vsel %vm465, %v436, 0
        %478 = vmatprep.subr.bf16.mxu0 %v410
        %479 = vmatpush1.bf16.msra.mxu0 %v409
        %480 = vmatprep.subr.bf16.mxu0 %v414
        %481 = vmatpush1.bf16.msra.mxu0 %v413
        %482 = vmatprep.subr.bf16.mxu0 %v418
        %483 = vmatpush1.bf16.msra.mxu0 %v417
        %484 = vmatprep.subr.bf16.mxu0 %v422
        %485 = vmatpush1.bf16.msra.mxu0 %v421
        %486 = vmatprep.subr.bf16.mxu0 %v426
        %487 = vmatpush1.bf16.msra.mxu0 %v425
        %488 = vmatprep.subr.bf16.mxu0 %v430
        %489 = vmatpush1.bf16.msra.mxu0 %v429
        %490 = vmatprep.subr.bf16.mxu0 %v470
        %491 = vmatpush1.bf16.msra.mxu0 %v467
        %492 = vmatprep.subr.bf16.mxu0 0
        %493 = vmatpush1.bf16.msra.mxu0 0
        %494 = vmatprep.subr.bf16.mxu0 0
        %495 = vmatpush1.bf16.msra.mxu0 0
        %496 = vmatprep.subr.bf16.mxu0 0
        %497 = vmatpush1.bf16.msra.mxu0 0
        %498 = vmatprep.subr.bf16.mxu0 0
        %499 = vmatpush1.bf16.msra.mxu0 0
        %500 = vmatprep.subr.bf16.mxu0 0
        %501 = vmatpush1.bf16.msra.mxu0 0
        %502 = vmatprep.subr.bf16.mxu0 0
        %503 = vmatpush1.bf16.msra.mxu0 0
        %504 = vmatprep.subr.bf16.mxu0 0
        %505 = vmatpush1.bf16.msra.mxu0 0
        %506 = vmatprep.subr.bf16.mxu0 0
        %507 = vmatpush1.bf16.msra.mxu0 0
        %508 = vmatprep.subr.bf16.mxu0 0
        %509 = vmatpush1.bf16.msra.mxu0 0
        %510 = vmatprep.mubr.bf16.mxu0 0
        %511 = vmatmul.mubr.bf16.gmra.mrb[0].mxu0 %v463
        %v512 = vpop.f32.mrb[0].mxu0
        %v513 = vadd.f32 0.0, %v512
        %v514 = vpop.f32.mrb[0].mxu0
        %v515 = vadd.f32 0.0, %v514
        %v516 = vpop.f32.mrb[0].mxu0
        %v517 = vpop.f32.mrb[0].mxu0
        %518 = vdwg.mxu0
        %519 = vmatprep.subr.bf16.mxu0 %v412
        %520 = vmatpush1.bf16.msra.mxu0 %v411
        %521 = vmatprep.subr.bf16.mxu0 %v416
        %522 = vmatpush1.bf16.msra.mxu0 %v415
        %523 = vmatprep.subr.bf16.mxu0 %v420
        %524 = vmatpush1.bf16.msra.mxu0 %v419
        %525 = vmatprep.subr.bf16.mxu0 %v424
        %526 = vmatpush1.bf16.msra.mxu0 %v423
        %527 = vmatprep.subr.bf16.mxu0 %v428
        %528 = vmatpush1.bf16.msra.mxu0 %v427
        %529 = vmatprep.subr.bf16.mxu0 %v432
        %530 = vmatpush1.bf16.msra.mxu0 %v431
        %531 = vmatprep.subr.bf16.mxu0 %v476
        %532 = vmatpush1.bf16.msra.mxu0 %v473
        %533 = vmatprep.subr.bf16.mxu0 0
        %534 = vmatpush1.bf16.msra.mxu0 0
        %535 = vmatprep.subr.bf16.mxu0 0
        %536 = vmatpush1.bf16.msra.mxu0 0
        %537 = vmatprep.subr.bf16.mxu0 0
        %538 = vmatpush1.bf16.msra.mxu0 0
        %539 = vmatprep.subr.bf16.mxu0 0
        %540 = vmatpush1.bf16.msra.mxu0 0
        %541 = vmatprep.subr.bf16.mxu0 0
        %542 = vmatpush1.bf16.msra.mxu0 0
        %543 = vmatprep.subr.bf16.mxu0 0
        %544 = vmatpush1.bf16.msra.mxu0 0
        %545 = vmatprep.subr.bf16.mxu0 0
        %546 = vmatpush1.bf16.msra.mxu0 0
        %547 = vmatprep.subr.bf16.mxu0 0
        %548 = vmatpush1.bf16.msra.mxu0 0
        %549 = vmatprep.subr.bf16.mxu0 0
        %550 = vmatpush1.bf16.msra.mxu0 0
        %551 = vmatprep.mubr.bf16.mxu0 0
        %552 = vmatmul.mubr.bf16.gmra.mrb[0].mxu0 %v463
        %v553 = vpop.f32.mrb[0].mxu0
        %v554 = vadd.f32 0.0, %v553
        %v555 = vpop.f32.mrb[0].mxu0
        %v556 = vadd.f32 0.0, %v555
        %v557 = vpop.f32.mrb[0].mxu0
        %v558 = vpop.f32.mrb[0].mxu0
        %559 = vdwg.mxu0
        %560 = vst [vmem:[%s285] sm:$0xff] %v513
        %561 = vst [vmem:[%s285 + $0x8] sm:$0xff] %v515
        %562 = vst [vmem:[%s285 + $0x10] sm:$0xff] %v554
        %563 = vst [vmem:[%s285 + $0x18] sm:$0xff] %v556
        %v564 = vadd.f32 %v513, %v515
        %v565 = vadd.f32 %v564, %v554
        %v566 = vadd.f32 %v565, %v556
        %567 = vadd.xlane.f32.xlu0 %v566
        %v568 = vpop.xlane.xlu0 %567
        %vm569 = vcmask 7168
        %570 = vst.msk [vmem:[%s290] sm:$0xff] %vm569, %v568
        %v571 = vmul.f32 %v513, %v513
        %v572 = vmul.f32 %v515, %v515
        %v573 = vmul.f32 %v554, %v554
        %v574 = vmul.f32 %v556, %v556
        %v575 = vadd.f32 %v571, %v572
        %v576 = vadd.f32 %v575, %v573
        %v577 = vadd.f32 %v576, %v574
        %578 = vadd.xlane.f32.xlu0 %v577
        %v579 = vpop.xlane.xlu0 %578
        %580 = vst.msk [vmem:[%s294] sm:$0xff] %vm569, %v579
        %s581 = smul.u32 4, %s16
        %p582 = scmp.lt.s32.totalorder %s581, 7
        %s583 = scalar_select %p582, %s581, 7
        %s584 = smul.addr %s583, 8
        %s585 = scalar_lea.vmem %s2, %s584
        %p586 = scmp.lt.s32.totalorder %s16, 1
        %s587 = scalar_select %p586, %s16, 1
        %s588 = smul.addr %s587, 8
        %s589 = scalar_lea.vmem %s3, %s588
        %p590 = scmp.lt.s32.totalorder %s16, 1
        %s591 = scalar_select %p590, %s16, 1
        %s592 = smul.addr %s591, 8
        %s593 = scalar_lea.vmem %s4, %s592
        // Predicated region
        $region52: #{base_conv_block_forward.2} parent=46 // pred_check
          %p594 = pneg %p81
        $region53: #{base_conv_block_forward.2} parent=46 // pred_check_branch
          %596 = sbr.rel (%p594) target = $region55
        $region54: #{base_conv_block_forward.2} parent=46 // pred_region
          %s597 = smul.u32 4, %s16
        $region55: #{base_conv_block_forward.2} parent=46 // pred_fallthru
          _
        // Predicated region
        $region56: #{base_conv_block_forward.2} parent=46 // pred_check
          %p598 = pneg %p107
        $region57: #{base_conv_block_forward.2} parent=46 // pred_check_branch
          %600 = sbr.rel (%p598) target = $region59
        $region58: #{base_conv_block_forward.2} parent=46 // pred_region
          _
        $region59: #{base_conv_block_forward.2} parent=46 // pred_fallthru
          _
        // Predicated region
        $region60: #{base_conv_block_forward.2} parent=46 // pred_check
          %p601 = pneg %p133
        $region61: #{base_conv_block_forward.2} parent=46 // pred_check_branch
          %603 = sbr.rel (%p601) target = $region63
        $region62: #{base_conv_block_forward.2} parent=46 // pred_region
          _
        $region63: #{base_conv_block_forward.2} parent=46 // pred_fallthru
          _
      $region47: #{base_conv_block_forward.2} parent=5 // pred_fallthru
        _
      %p604 = scmp.le.s32.totalorder 2, %s11
      // Predicated region
      $region64: #{base_conv_block_forward.2} parent=5 // pred_check
        %p605 = pneg %p604
      $region65: #{base_conv_block_forward.2} parent=5 // pred_check_branch
        %607 = sbr.rel (%p605) target = $region67
      $region66: #{base_conv_block_forward.2} parent=5 // pred_region
        %s608 = ssub.s32 %s11, 2
        // Predicated region
        $region68: #{base_conv_block_forward.2} parent=66 // pred_check
          %p609 = pneg %p87
        $region69: #{base_conv_block_forward.2} parent=66 // pred_check_branch
          %611 = sbr.rel (%p609) target = $region71
        $region70: #{base_conv_block_forward.2} parent=66 // pred_region
          %s612 = smul.u32 4, %s17
          %p613 = scmp.lt.s32.totalorder %s612, 7
          %s614 = scalar_select %p613, %s612, 7
          %s615 = smul.addr %s614, 8
          %s616 = scalar_lea.vmem %s2, %s615
        $region71: #{base_conv_block_forward.2} parent=66 // pred_fallthru
          _
        // Predicated region
        $region72: #{base_conv_block_forward.2} parent=66 // pred_check
          %p617 = pneg %p113
        $region73: #{base_conv_block_forward.2} parent=66 // pred_check_branch
          %619 = sbr.rel (%p617) target = $region75
        $region74: #{base_conv_block_forward.2} parent=66 // pred_region
          %p620 = scmp.lt.s32.totalorder %s17, 1
          %s621 = scalar_select %p620, %s17, 1
          %s622 = smul.addr %s621, 8
          %s623 = scalar_lea.vmem %s3, %s622
        $region75: #{base_conv_block_forward.2} parent=66 // pred_fallthru
          _
        // Predicated region
        $region76: #{base_conv_block_forward.2} parent=66 // pred_check
          %p624 = pneg %p139
        $region77: #{base_conv_block_forward.2} parent=66 // pred_check_branch
          %626 = sbr.rel (%p624) target = $region79
        $region78: #{base_conv_block_forward.2} parent=66 // pred_region
          %p627 = scmp.lt.s32.totalorder %s17, 1
          %s628 = scalar_select %p627, %s17, 1
          %s629 = smul.addr %s628, 8
          %s630 = scalar_lea.vmem %s4, %s629
        $region79: #{base_conv_block_forward.2} parent=66 // pred_fallthru
          _
      $region67: #{base_conv_block_forward.2} parent=5 // pred_fallthru
        _
    $region6: #{base_conv_block_forward.2} parent=1 // loop_footer
      %s15 = sadd.s32 1, %s11
    $region7: #{base_conv_block_forward.2} parent=1 // loop_footer_branch
      %10 = sbr.rel target = $region3
    $region8: #{base_conv_block_forward.2} parent=1 // loop_exit
      _

// kernel: base_conv_block_forward.3
$region0: #{base_conv_block_forward.3}
  #allocation0 [shape = 'u32[]', space=smem, size = 0x4, offset = 0x4, fixed_abs, tag = 'smem constant byte address 0x4 - core index']
  #allocation1 [shape = 'u32[144,128]{1,0:T(1,128)}', space=vmem, size = 0x12000, scoped, tag = 'internal scratch']
  %s0 = inlined_call_operand.vmem [shape: f32[8,1024], index: 0, kind: input, shape index: {}, may-alias: {0,3}]
  %s1 = inlined_call_operand.vmem [shape: f32[8,1], index: 1, kind: input, shape index: {}]
  %s2 = inlined_call_operand.vmem [shape: f32[8,1], index: 2, kind: input, shape index: {}]
  %s3 = inlined_call_operand.vmem [shape: f32[8,1024], index: 3, kind: output, shape index: {}, may-alias: {0,3}]
  %s4 = sld [smem:[#allocation0]]
  $region45: #{base_conv_block_forward.3} parent=0
    _
  %s6 = ssub.s32 1, %s4
  %s7 = scalar_select 0, %s6, %s4
  loop: start=0, step=1, limit=4
  $region2: #{base_conv_block_forward.3} parent=0 // loop_pre_header
    _
  $region3: #{base_conv_block_forward.3} parent=0 // loop_header
    %s9 = sphi 0, %s13
    %p10 = scmp.ge.s32.totalorder %s9, 4
    %s19 = sphi 0, %s21
    %s22 = sphi 0, %s19
    %s23 = sphi 0, %s22
    %s39 = sphi 0, %s23
    %s43 = sphi 0, %s43
    %s45 = sphi 0, %s43
    %s46 = sphi 0, %s45
    %s60 = sphi 0, %s46
    %s64 = sphi 0, %s64
    %s66 = sphi 0, %s64
    %s67 = sphi 0, %s66
    %s81 = sphi 0, %s67
    %s87 = sphi 0, %s89
    %s90 = sphi 0, %s87
    %s91 = sphi 0, %s90
    %s107 = sphi 0, %s91
  $region4: #{base_conv_block_forward.3} parent=0 // loop_header_branch
    %12 = sbr.rel (%p10) target = $region8
  $region5: #{base_conv_block_forward.3} parent=0 // loop_body
    %s14 = ssub.s32 %s9, 1
    %s15 = ssub.s32 %s9, 2
    %s16 = sadd.s32 %s9, 1
    %s17 = ssub.s32 %s9, %s16
    %p18 = scmp.eq.s32.totalorder %s17, 0
    %s20 = sadd.s32 %s19, 1
    %s21 = scalar_select %p18, %s19, %s20
    %p24 = pneg %p18
    %p25 = scmp.eq.s32.totalorder %s9, 1
    %p26 = por %p24, %p25
    %p27 = scmp.ne.s32.totalorder %s19, %s22
    %p28 = scmp.eq.s32.totalorder %s9, 0
    %p29 = por %p27, %p28
    %p30 = scmp.ne.s32.totalorder %s19, %s22
    %p31 = scmp.eq.s32.totalorder %s14, 1
    %p32 = por %p30, %p31
    %p33 = scmp.ne.s32.totalorder %s22, %s23
    %p34 = scmp.eq.s32.totalorder %s14, 0
    %p35 = por %p33, %p34
    %p36 = scmp.ne.s32.totalorder %s22, %s23
    %p37 = scmp.eq.s32.totalorder %s15, 1
    %p38 = por %p36, %p37
    %p40 = scmp.ne.s32.totalorder %s23, %s39
    %p41 = scmp.eq.s32.totalorder %s15, 0
    %p42 = por %p40, %p41
    %s44 = sadd.s32 %s43, 1
    %p47 = scmp.eq.s32.totalorder %s9, 1
    %p48 = scmp.ne.s32.totalorder %s43, %s45
    %p49 = scmp.eq.s32.totalorder %s9, 0
    %p50 = por %p48, %p49
    %p51 = scmp.ne.s32.totalorder %s43, %s45
    %p52 = scmp.eq.s32.totalorder %s14, 1
    %p53 = por %p51, %p52
    %p54 = scmp.ne.s32.totalorder %s45, %s46
    %p55 = scmp.eq.s32.totalorder %s14, 0
    %p56 = por %p54, %p55
    %p57 = scmp.ne.s32.totalorder %s45, %s46
    %p58 = scmp.eq.s32.totalorder %s15, 1
    %p59 = por %p57, %p58
    %p61 = scmp.ne.s32.totalorder %s46, %s60
    %p62 = scmp.eq.s32.totalorder %s15, 0
    %p63 = por %p61, %p62
    %s65 = sadd.s32 %s64, 1
    %p68 = scmp.eq.s32.totalorder %s9, 1
    %p69 = scmp.ne.s32.totalorder %s64, %s66
    %p70 = scmp.eq.s32.totalorder %s9, 0
    %p71 = por %p69, %p70
    %p72 = scmp.ne.s32.totalorder %s64, %s66
    %p73 = scmp.eq.s32.totalorder %s14, 1
    %p74 = por %p72, %p73
    %p75 = scmp.ne.s32.totalorder %s66, %s67
    %p76 = scmp.eq.s32.totalorder %s14, 0
    %p77 = por %p75, %p76
    %p78 = scmp.ne.s32.totalorder %s66, %s67
    %p79 = scmp.eq.s32.totalorder %s15, 1
    %p80 = por %p78, %p79
    %p82 = scmp.ne.s32.totalorder %s67, %s81
    %p83 = scmp.eq.s32.totalorder %s15, 0
    %p84 = por %p82, %p83
    %s85 = ssub.s32 %s9, %s16
    %p86 = scmp.eq.s32.totalorder %s85, 0
    %s88 = sadd.s32 %s87, 1
    %s89 = scalar_select %p86, %s87, %s88
    %p92 = pneg %p86
    %p93 = scmp.eq.s32.totalorder %s9, 1
    %p94 = por %p92, %p93
    %p95 = scmp.ne.s32.totalorder %s87, %s90
    %p96 = scmp.eq.s32.totalorder %s9, 0
    %p97 = por %p95, %p96
    %p98 = scmp.ne.s32.totalorder %s87, %s90
    %p99 = scmp.eq.s32.totalorder %s14, 1
    %p100 = por %p98, %p99
    %p101 = scmp.ne.s32.totalorder %s90, %s91
    %p102 = scmp.eq.s32.totalorder %s14, 0
    %p103 = por %p101, %p102
    %p104 = scmp.ne.s32.totalorder %s90, %s91
    %p105 = scmp.eq.s32.totalorder %s15, 1
    %p106 = por %p104, %p105
    %p108 = scmp.ne.s32.totalorder %s91, %s107
    %p109 = scmp.eq.s32.totalorder %s15, 0
    %p110 = por %p108, %p109
    %p111 = scmp.le.s32.totalorder 1, %s9
    %p112 = scmp.lt.s32.totalorder %s9, 3
    %p113 = pnand %p111, %p112
    %p114 = pneg %p113
    // Predicated region
    $region9: #{base_conv_block_forward.3} parent=5 // pred_check
      _
    $region10: #{base_conv_block_forward.3} parent=5 // pred_check_branch
      %116 = sbr.rel (%p113) target = $region12
    $region11: #{base_conv_block_forward.3} parent=5 // pred_region
      %s117 = ssub.s32 %s9, 1
      // Predicated region
      $region13: #{base_conv_block_forward.3} parent=11 // pred_check
        %p118 = pneg %p56
      $region14: #{base_conv_block_forward.3} parent=11 // pred_check_branch
        %120 = sbr.rel (%p118) target = $region16
      $region15: #{base_conv_block_forward.3} parent=11 // pred_region
        _
      $region16: #{base_conv_block_forward.3} parent=11 // pred_fallthru
        _
      // Predicated region
      $region17: #{base_conv_block_forward.3} parent=11 // pred_check
        %p121 = pneg %p77
      $region18: #{base_conv_block_forward.3} parent=11 // pred_check_branch
        %123 = sbr.rel (%p121) target = $region20
      $region19: #{base_conv_block_forward.3} parent=11 // pred_region
        _
      $region20: #{base_conv_block_forward.3} parent=11 // pred_fallthru
        _
    $region12: #{base_conv_block_forward.3} parent=5 // pred_fallthru
      _
    %p124 = scmp.lt.s32.totalorder %s9, 2
    // Predicated region
    $region21: #{base_conv_block_forward.3} parent=5 // pred_check
      %p125 = pneg %p124
    $region22: #{base_conv_block_forward.3} parent=5 // pred_check_branch
      %127 = sbr.rel (%p125) target = $region24
    $region23: #{base_conv_block_forward.3} parent=5 // pred_region
      // Predicated region
      $region25: #{base_conv_block_forward.3} parent=23 // pred_check
        %p128 = pneg %p29
      $region26: #{base_conv_block_forward.3} parent=23 // pred_check_branch
        %130 = sbr.rel (%p128) target = $region28
      $region27: #{base_conv_block_forward.3} parent=23 // pred_region
        %s131 = smul.u32 4, %s9
        %p132 = scmp.lt.s32.totalorder %s131, 7
        %s133 = scalar_select %p132, %s131, 7
        %s134 = smul.addr %s133, 8
        %s135 = scalar_lea.vmem %s0, %s134
        %s136 = smul.u32 4, %s9
      $region28: #{base_conv_block_forward.3} parent=23 // pred_fallthru
        _
    $region24: #{base_conv_block_forward.3} parent=5 // pred_fallthru
      _
    %p137 = scmp.le.s32.totalorder 1, %s9
    %p138 = scmp.lt.s32.totalorder %s9, 3
    %p139 = pnand %p137, %p138
    %p140 = pneg %p139
    // Predicated region
    $region29: #{base_conv_block_forward.3} parent=5 // pred_check
      _
    $region30: #{base_conv_block_forward.3} parent=5 // pred_check_branch
      %142 = sbr.rel (%p139) target = $region32
    $region31: #{base_conv_block_forward.3} parent=5 // pred_region
      %s143 = ssub.s32 %s9, 1
      %s144 = smul.u32 4, %s14
      %p145 = scmp.lt.s32.totalorder %s144, 7
      %s146 = scalar_select %p145, %s144, 7
      %s147 = smul.addr %s146, 8
      %s148 = scalar_lea.vmem %s0, %s147
      %p149 = pneg %p35
      %p150 = pneg %p32
      %p151 = pneg %p56
      %p152 = pneg %p53
      %p153 = pneg %p77
      %p154 = pneg %p74
      %p155 = pneg %p103
      %p156 = pneg %p100
      %s157 = smul.u32 4, %s14
      %p158 = scmp.lt.s32.totalorder %s157, 7
      %s159 = scalar_select %p158, %s157, 7
      %s160 = smul.addr %s159, 8
      %s161 = scalar_lea.vmem %s3, %s160
      %s162 = smul.u32 4, %s14
      %p163 = scmp.lt.s32.totalorder %s162, 7
      %s164 = scalar_select %p163, %s162, 7
      %s165 = smul.addr %s164, 8
      %s166 = scalar_lea.vmem %s0, %s165
      %s167 = smul.u32 4, %s14
      %s168 = smul.u32 4, %s14
      %p169 = scmp.lt.s32.totalorder %s168, 7
      %s170 = scalar_select %p169, %s168, 7
      %s171 = smul.addr %s170, 8
      %s172 = scalar_lea.vmem %s3, %s171
      %s173 = smul.u32 4, %s14
      %v174 = vld [vmem:[%s166] sm:$0xff]
      %v175 = vld [vmem:[%s166 + $0x8] sm:$0xff]
      %v176 = vld [vmem:[%s166 + $0x10] sm:$0xff]
      %v177 = vld [vmem:[%s166 + $0x18] sm:$0xff]
      %v178 = vld [vmem:[%s1] sm:$0xff]
      %180 = vset.pattern.permute.xlu0 0
      %181 = vperm.xlu0 %180, %v178
      %v182 = vpop.permute.xlu0 %181
      %v184 = vmul.f32 %v174, %v182
      %v185 = vmul.f32 %v175, %v182
      %v186 = vmul.f32 %v176, %v182
      %v187 = vmul.f32 %v177, %v182
      %v188 = vld [vmem:[%s2] sm:$0xff]
      %190 = vset.pattern.permute.xlu0 0
      %191 = vperm.xlu0 %190, %v188
      %v192 = vpop.permute.xlu0 %191
      %v194 = vadd.f32 %v184, %v192
      %v195 = vadd.f32 %v185, %v192
      %v196 = vadd.f32 %v186, %v192
      %v197 = vadd.f32 %v187, %v192
      %v198 = vmax.f32 %v194, 0.0
      %v199 = vmax.f32 %v195, 0.0
      %v200 = vmax.f32 %v196, 0.0
      %v201 = vmax.f32 %v197, 0.0
      %202 = vst [vmem:[%s172] sm:$0xff] %v198
      %203 = vst [vmem:[%s172 + $0x8] sm:$0xff] %v199
      %204 = vst [vmem:[%s172 + $0x10] sm:$0xff] %v200
      %205 = vst [vmem:[%s172 + $0x18] sm:$0xff] %v201
      %s206 = smul.u32 4, %s14
      %p207 = scmp.lt.s32.totalorder %s206, 7
      %s208 = scalar_select %p207, %s206, 7
      %s209 = smul.addr %s208, 8
      %s210 = scalar_lea.vmem %s3, %s209
      // Predicated region
      $region33: #{base_conv_block_forward.3} parent=31 // pred_check
        %p211 = pneg %p100
      $region34: #{base_conv_block_forward.3} parent=31 // pred_check_branch
        %213 = sbr.rel (%p211) target = $region36
      $region35: #{base_conv_block_forward.3} parent=31 // pred_region
        %s214 = smul.u32 4, %s14
      $region36: #{base_conv_block_forward.3} parent=31 // pred_fallthru
        _
    $region32: #{base_conv_block_forward.3} parent=5 // pred_fallthru
      _
    %p215 = scmp.le.s32.totalorder 2, %s9
    // Predicated region
    $region37: #{base_conv_block_forward.3} parent=5 // pred_check
      %p216 = pneg %p215
    $region38: #{base_conv_block_forward.3} parent=5 // pred_check_branch
      %218 = sbr.rel (%p216) target = $region40
    $region39: #{base_conv_block_forward.3} parent=5 // pred_region
      %s219 = ssub.s32 %s9, 2
      // Predicated region
      $region41: #{base_conv_block_forward.3} parent=39 // pred_check
        %p220 = pneg %p106
      $region42: #{base_conv_block_forward.3} parent=39 // pred_check_branch
        %222 = sbr.rel (%p220) target = $region44
      $region43: #{base_conv_block_forward.3} parent=39 // pred_region
        %s223 = smul.u32 4, %s15
        %p224 = scmp.lt.s32.totalorder %s223, 7
        %s225 = scalar_select %p224, %s223, 7
        %s226 = smul.addr %s225, 8
        %s227 = scalar_lea.vmem %s3, %s226
      $region44: #{base_conv_block_forward.3} parent=39 // pred_fallthru
        _
    $region40: #{base_conv_block_forward.3} parent=5 // pred_fallthru
      _
  $region6: #{base_conv_block_forward.3} parent=0 // loop_footer
    %s13 = sadd.s32 1, %s9
  $region7: #{base_conv_block_forward.3} parent=0 // loop_footer_branch
    %8 = sbr.rel target = $region3
  $region8: #{base_conv_block_forward.3} parent=0 // loop_exit
    _

</llo_original>
